<compile_context>
chip_gen: v7x
topology: tpu7x:2x2x1
jax: 0.10.0
libtpu: 0.0.40
codegen_flags: <defaults>
</compile_context>

<pallas_src>
import functools

import jax
import jax.numpy as jnp
from jax import lax
from jax.experimental import pallas as pl
from jax.experimental.pallas import tpu as pltpu

_LANES = 128
_SUBLANES = 8
_MAX_TILE_B = 4096                 # cap on batch-tile rows
_VMEM_BUDGET = 12 * 1024 * 1024    # stay well under v5e's 16 MiB default scoped VMEM


def _round_up(x, m):
    return ((x + m - 1) // m) * m


def _cdiv(a, b):
    return (a + b - 1) // b


def _choose_tile_b(batch, k):
    """Pick a batch tile (multiple of 128, since batch sits on the lane axis of the
    transposed output) that amortizes per-step grid overhead, fits double-buffered
    VMEM for any in_features, and uses >=2 tiles for moderate batches (v7x has 2 TCs)."""
    # Double-buffered f32 bytes per batch row: x row (K values) + transposed
    # output column (8 sublanes). Weight/bias are O(K) and negligible.
    bytes_per_row = 2 * 4 * (k + _SUBLANES)
    vmem_rows = max(_LANES, (_VMEM_BUDGET // bytes_per_row) // _LANES * _LANES)
    max_tile = min(_MAX_TILE_B, vmem_rows)

    n_tiles = _cdiv(batch, max_tile)
    # v7x: give the "parallel" grid axis >=2 steps when the batch is big enough
    # that splitting adds (almost) no extra padding; harmless on v5e/v6e.
    if n_tiles == 1 and batch >= 2 * _LANES:
        n_tiles = 2
    return _round_up(_cdiv(batch, n_tiles), _LANES)


def _annet_kernel(x_ref, w_ref, b_ref, o_ref):
    # x_ref: (tile_b, K)   activation tile (batch rows on sublanes)
    # w_ref: (N8, K)       weight in PyTorch layout, out_features padded to 8
    # b_ref: (N8, 1)       bias column
    # o_ref: (N8, tile_b)  transposed, lane-dense output tile
    yt = lax.dot_general(
        w_ref[...], x_ref[...],
        dimension_numbers=(((1,), (1,)), ((), ())),   # contract both operands on K
        preferred_element_type=jnp.float32,
    )
    o_ref[...] = jnp.maximum(yt + b_ref[...], 0.0).astype(o_ref.dtype)


def prepare_annet_params(weight, bias):
    """One-time (parameter-init-time) prep: pad out_features up to 8 sublanes.

    weight: (out_features, in_features), bias: (out_features,)  [PyTorch nn.Linear layout]
    """
    n, _ = weight.shape
    n8 = _round_up(n, _SUBLANES)
    w = jnp.pad(weight.astype(jnp.float32), ((0, n8 - n), (0, 0)))
    b = jnp.pad(bias.astype(jnp.float32), (0, n8 - n)).reshape(n8, 1)
    return w, b


@functools.partial(jax.jit, static_argnames=("out_features",))
def annet_forward(x, w_padded, b_padded, out_features):
    """Pallas implementation of ANNet.forward: relu(x @ weight.T + bias).

    Args:
      x:        (B, in_features) float32
      w_padded: (N8, in_features) float32, from prepare_annet_params
      b_padded: (N8, 1) float32, from prepare_annet_params
      out_features: original (unpadded) output width
    Returns:
      (B, out_features) float32
    """
    batch, k = x.shape
    n8 = w_padded.shape[0]

    tile_b = _choose_tile_b(batch, k)
    b_pad = _round_up(batch, tile_b)
    if b_pad != batch:
        x = jnp.pad(x, ((0, b_pad - batch), (0, 0)))
    x = x.astype(jnp.float32)

    grid = (b_pad // tile_b,)

    out_t = pl.pallas_call(
        _annet_kernel,
        out_shape=jax.ShapeDtypeStruct((n8, b_pad), jnp.float32),
        grid=grid,
        in_specs=[
            pl.BlockSpec((tile_b, k), lambda i: (i, 0)),   # batch-tiled activations
            pl.BlockSpec((n8, k), lambda i: (0, 0)),       # weight, resident across tiles
            pl.BlockSpec((n8, 1), lambda i: (0, 0)),       # bias, resident across tiles
        ],
        out_specs=pl.BlockSpec((n8, tile_b), lambda i: (0, i)),
        compiler_params=pltpu.CompilerParams(
            dimension_semantics=("parallel",)),            # shard batch tiles across TCs (v7x)
    )(x, w_padded, b_padded)

    # Tiny (out_features x batch) slice + transpose restores the module's (B, N) output.
    return out_t[:out_features, :batch].T


def annet_reference(x, weight, bias):
    return jnp.maximum(x @ weight.T + bias, 0.0)


if __name__ == "__main__":
    key = jax.random.PRNGKey(0)
    in_features = 32
    out_features = 5   # fixed by the module: nn.Linear(in_features, 5)
    batch = 8

    kx, kw, kb = jax.random.split(key, 3)
    x = jax.random.normal(kx, (batch, in_features), dtype=jnp.float32)
    # Deterministic parameter init (mimics nn.Linear's uniform(-1/sqrt(fan_in), 1/sqrt(fan_in)))
    bound = 1.0 / jnp.sqrt(jnp.float32(in_features))
    weight = jax.random.uniform(kw, (out_features, in_features),
                                dtype=jnp.float32, minval=-bound, maxval=bound)
    bias = jax.random.uniform(kb, (out_features,),
                              dtype=jnp.float32, minval=-bound, maxval=bound)

    w_p, b_p = prepare_annet_params(weight, bias)   # hoisted out of the jitted forward
    out = annet_forward(x, w_p, b_p, out_features)
    out = jax.block_until_ready(out)

    ref = annet_reference(x, weight, bias)
    assert out.shape == (batch, out_features)
    assert jnp.allclose(out, ref, atol=1e-5, rtol=1e-5)

    print("KERNEL_OK")
</pallas_src>

<mosaic_0001>
module attributes {stable_mosaic.version = 11 : i64} {
  func.func @_annet_kernel(%arg0: i32, %arg1: memref<128x32xf32, #tpu.memory_space<vmem>>, %arg2: memref<8x32xf32, #tpu.memory_space<vmem>>, %arg3: memref<8x1xf32, #tpu.memory_space<vmem>>, %arg4: memref<8x128xf32, #tpu.memory_space<vmem>>) attributes {dimension_semantics = [#tpu.dimension_semantics<parallel>], iteration_bounds = array<i64: 1>, scalar_prefetch = 0 : i64, scratch_operands = 0 : i64, tpu.core_type = #tpu.core_type<tc>, window_params = [{transform_indices = @transform_0, window_bounds = array<i64: 128, 32>}, {pipeline_mode = #tpu.pipeline_mode<synchronous>, transform_indices = @transform_1, window_bounds = array<i64: 8, 32>}, {pipeline_mode = #tpu.pipeline_mode<synchronous>, transform_indices = @transform_2, window_bounds = array<i64: 8, 1>}, {transform_indices = @transform_3, window_bounds = array<i64: 8, 128>}]} {
    %c0 = arith.constant 0 : index
    %c0_0 = arith.constant 0 : index
    %0 = vector.load %arg2[%c0, %c0_0] : memref<8x32xf32, #tpu.memory_space<vmem>>, vector<8x32xf32>
    %c0_1 = arith.constant 0 : index
    %c0_2 = arith.constant 0 : index
    %1 = vector.load %arg1[%c0_1, %c0_2] : memref<128x32xf32, #tpu.memory_space<vmem>>, vector<128x32xf32>
    %cst = arith.constant dense<0.000000e+00> : vector<8x128xf32>
    %2 = tpu.matmul %0, %1, %cst {dimension_numbers = #tpu.dot_dimension_numbers<[1], [1], [0], [0], [0, 0, 1, 0], [], []>} : vector<8x32xf32>, vector<128x32xf32>, vector<8x128xf32> -> vector<8x128xf32>
    %c0_3 = arith.constant 0 : index
    %c0_4 = arith.constant 0 : index
    %3 = vector.load %arg3[%c0_3, %c0_4] : memref<8x1xf32, #tpu.memory_space<vmem>>, vector<8x1xf32>
    %4 = vector.broadcast %3 : vector<8x1xf32> to vector<8x128xf32>
    %5 = arith.addf %2, %4 : vector<8x128xf32>
    %cst_5 = arith.constant 0.000000e+00 : f32
    %6 = vector.broadcast %cst_5 : f32 to vector<8x128xf32>
    %7 = arith.maximumf %5, %6 : vector<8x128xf32>
    %c0_6 = arith.constant 0 : index
    %c0_7 = arith.constant 0 : index
    %8 = vector.load %arg4[%c0_6, %c0_7] : memref<8x128xf32, #tpu.memory_space<vmem>>, vector<8x128xf32>
    tpu.vector_store %arg4[%c0_6, %c0_7], %7 {strides = array<i32>} : memref<8x128xf32, #tpu.memory_space<vmem>>, vector<8x128xf32>,
    return
  }
  func.func @transform_0(%arg0: i32) -> (i32, i32) {
    %c0_i32 = arith.constant 0 : i32
    %c0_i32_0 = arith.constant 0 : i32
    return %arg0, %c0_i32 : i32, i32
  }
  func.func @transform_1(%arg0: i32) -> (i32, i32) {
    %c0_i32 = arith.constant 0 : i32
    %c0_i32_0 = arith.constant 0 : i32
    %c0_i32_1 = arith.constant 0 : i32
    return %c0_i32, %c0_i32_0 : i32, i32
  }
  func.func @transform_2(%arg0: i32) -> (i32, i32) {
    %c0_i32 = arith.constant 0 : i32
    %c0_i32_0 = arith.constant 0 : i32
    %c0_i32_1 = arith.constant 0 : i32
    return %c0_i32, %c0_i32_0 : i32, i32
  }
  func.func @transform_3(%arg0: i32) -> (i32, i32) {
    %c0_i32 = arith.constant 0 : i32
    %c0_i32_0 = arith.constant 0 : i32
    return %c0_i32, %arg0 : i32, i32
  }
}

</mosaic_0001>

<llo_original>
// kernel: annet_forward.1
$region0: #{annet_forward.1}
  #allocation0 [shape = 'u32[]', space=smem, size = 0x4, offset = 0x4, fixed_abs, tag = 'smem constant byte address 0x4 - core index']
  #allocation1 [shape = 'u32[144,128]{1,0:T(1,128)}', space=vmem, size = 0x12000, scoped, tag = 'internal scratch']
  %s0 = inlined_call_operand.vmem [shape: f32[128,32], index: 0, kind: input, shape index: {}]
  %s1 = inlined_call_operand.vmem [shape: f32[8,32], index: 1, kind: input, shape index: {}]
  %s2 = inlined_call_operand.vmem [shape: f32[8,1], index: 2, kind: input, shape index: {}]
  %s3 = inlined_call_operand.vmem [shape: f32[8,128], index: 3, kind: output, shape index: {}]
  %s4 = sld [smem:[#allocation0]]
  $region22: #{annet_forward.1} parent=0
    _
  %s6 = ssub.s32 1, %s4
  %s7 = scalar_select 0, %s6, %s4
  // Predicated region
  $region2: #{annet_forward.1} parent=0 // pred_check
    _
  $region3: #{annet_forward.1} parent=0 // pred_check_branch
    %9 = sbr.rel (0) target = $region5
  $region4: #{annet_forward.1} parent=0 // pred_region
    _
  $region5: #{annet_forward.1} parent=0 // pred_fallthru
    _
  // Predicated region
  $region6: #{annet_forward.1} parent=0 // pred_check
    _
  $region7: #{annet_forward.1} parent=0 // pred_check_branch
    %11 = sbr.rel (0) target = $region9
  $region8: #{annet_forward.1} parent=0 // pred_region
    _
  $region9: #{annet_forward.1} parent=0 // pred_fallthru
    _
  // Predicated region
  $region10: #{annet_forward.1} parent=0 // pred_check
    _
  $region11: #{annet_forward.1} parent=0 // pred_check_branch
    %13 = sbr.rel (0) target = $region13
  $region12: #{annet_forward.1} parent=0 // pred_region
    _
  $region13: #{annet_forward.1} parent=0 // pred_fallthru
    _
  %v14 = vld [vmem:[%s1] sm:$0xff]
  %v15 = vld [vmem:[%s0] sm:$0xff]
  %v16 = vld [vmem:[%s0 + $0x8] sm:$0xff]
  %v17 = vld [vmem:[%s0 + $0x10] sm:$0xff]
  %v18 = vld [vmem:[%s0 + $0x18] sm:$0xff]
  %v19 = vld [vmem:[%s0 + $0x20] sm:$0xff]
  %v20 = vld [vmem:[%s0 + $0x28] sm:$0xff]
  %v21 = vld [vmem:[%s0 + $0x30] sm:$0xff]
  %v22 = vld [vmem:[%s0 + $0x38] sm:$0xff]
  %v23 = vld [vmem:[%s0 + $0x40] sm:$0xff]
  %v24 = vld [vmem:[%s0 + $0x48] sm:$0xff]
  %v25 = vld [vmem:[%s0 + $0x50] sm:$0xff]
  %v26 = vld [vmem:[%s0 + $0x58] sm:$0xff]
  %v27 = vld [vmem:[%s0 + $0x60] sm:$0xff]
  %v28 = vld [vmem:[%s0 + $0x68] sm:$0xff]
  %v29 = vld [vmem:[%s0 + $0x70] sm:$0xff]
  %v30 = vld [vmem:[%s0 + $0x78] sm:$0xff]
  %v31 = vld [vmem:[%s2] sm:$0xff]
  %33 = vset.pattern.permute.xlu0 0
  %34 = vperm.xlu0 %33, %v31
  %v35 = vpop.permute.xlu0 %34
  %vm37 = vcmask 261120
  %v39 = vsel %vm37, %v14, 0
  %v42 = vsel %vm37, %v15, 0
  %v45 = vsel %vm37, %v16, 0
  %v48 = vsel %vm37, %v17, 0
  %v51 = vsel %vm37, %v18, 0
  %v54 = vsel %vm37, %v19, 0
  %v57 = vsel %vm37, %v20, 0
  %v60 = vsel %vm37, %v21, 0
  %v63 = vsel %vm37, %v22, 0
  %v66 = vsel %vm37, %v23, 0
  %v69 = vsel %vm37, %v24, 0
  %v72 = vsel %vm37, %v25, 0
  %v75 = vsel %vm37, %v26, 0
  %v78 = vsel %vm37, %v27, 0
  %v81 = vsel %vm37, %v28, 0
  %v84 = vsel %vm37, %v29, 0
  %v87 = vsel %vm37, %v30, 0
  %89 = vmatprep.subr.mxu0 0.0
  %90 = vmatpush1.xpose.msra.mxu0 %v42
  %91 = vmatprep.subr.mxu0 0.0
  %92 = vmatpush1.xpose.msra.mxu0 %v45
  %93 = vmatprep.subr.mxu0 0.0
  %94 = vmatpush1.xpose.msra.mxu0 %v48
  %95 = vmatprep.subr.mxu0 0.0
  %96 = vmatpush1.xpose.msra.mxu0 %v51
  %97 = vmatprep.subr.mxu0 0.0
  %98 = vmatpush1.xpose.msra.mxu0 %v54
  %99 = vmatprep.subr.mxu0 0.0
  %100 = vmatpush1.xpose.msra.mxu0 %v57
  %101 = vmatprep.subr.mxu0 0.0
  %102 = vmatpush1.xpose.msra.mxu0 %v60
  %103 = vmatprep.subr.mxu0 0.0
  %104 = vmatpush1.xpose.msra.mxu0 %v63
  %105 = vmatprep.subr.mxu0 0.0
  %106 = vmatpush1.xpose.msra.mxu0 %v66
  %107 = vmatprep.subr.mxu0 0.0
  %108 = vmatpush1.xpose.msra.mxu0 %v69
  %109 = vmatprep.subr.mxu0 0.0
  %110 = vmatpush1.xpose.msra.mxu0 %v72
  %111 = vmatprep.subr.mxu0 0.0
  %112 = vmatpush1.xpose.msra.mxu0 %v75
  %113 = vmatprep.subr.mxu0 0.0
  %114 = vmatpush1.xpose.msra.mxu0 %v78
  %115 = vmatprep.subr.mxu0 0.0
  %116 = vmatpush1.xpose.msra.mxu0 %v81
  %117 = vmatprep.subr.mxu0 0.0
  %118 = vmatpush1.xpose.msra.mxu0 %v84
  %119 = vmatprep.subr.mxu0 0.0
  %120 = vmatpush1.xpose.msra.mxu0 %v87
  %121 = vmatprep.subr.mxu0 0.0
  %122 = vmatpush1.xpose.msra.mxu0 0.0
  %123 = vmatprep.subr.mxu0 0.0
  %124 = vmatpush1.xpose.msra.mxu0 0.0
  %125 = vmatprep.subr.mxu0 0.0
  %126 = vmatpush1.xpose.msra.mxu0 0.0
  %127 = vmatprep.subr.mxu0 0.0
  %128 = vmatpush1.xpose.msra.mxu0 0.0
  %129 = vmatprep.subr.mxu0 0.0
  %130 = vmatpush1.xpose.msra.mxu0 0.0
  %131 = vmatprep.subr.mxu0 0.0
  %132 = vmatpush1.xpose.msra.mxu0 0.0
  %133 = vmatprep.subr.mxu0 0.0
  %134 = vmatpush1.xpose.msra.mxu0 0.0
  %135 = vmatprep.subr.mxu0 0.0
  %136 = vmatpush1.xpose.msra.mxu0 0.0
  %137 = vmatprep.subr.mxu0 0.0
  %138 = vmatpush1.xpose.msra.mxu0 0.0
  %139 = vmatprep.subr.mxu0 0.0
  %140 = vmatpush1.xpose.msra.mxu0 0.0
  %141 = vmatprep.subr.mxu0 0.0
  %142 = vmatpush1.xpose.msra.mxu0 0.0
  %143 = vmatprep.subr.mxu0 0.0
  %144 = vmatpush1.xpose.msra.mxu0 0.0
  %145 = vmatprep.subr.mxu0 0.0
  %146 = vmatpush1.xpose.msra.mxu0 0.0
  %147 = vmatprep.subr.mxu0 0.0
  %148 = vmatpush1.xpose.msra.mxu0 0.0
  %149 = vmatprep.subr.mxu0 0.0
  %150 = vmatpush1.xpose.msra.mxu0 0.0
  %151 = vmatprep.subr.mxu0 0.0
  %152 = vmatpush1.xpose.msra.mxu0 0.0
  %153 = vmatprep.mubr.f32.mxu0 0.0
  %154 = vmatmul.mubr.f32.gmra.mrb[0].mxu0 %v39
  %v155 = vpop.f32.mrb[0].mxu0
  %v156 = vadd.f32 %v35, %v155
  %v157 = vpop.f32.mrb[0].mxu0
  %158 = vdwg.mxu0
  %v159 = vmax.f32 %v156, 0.0
  %160 = vst [vmem:[%s3] sm:$0xff] %v159
  // Predicated region
  $region14: #{annet_forward.1} parent=0 // pred_check
    _
  $region15: #{annet_forward.1} parent=0 // pred_check_branch
    %162 = sbr.rel (0) target = $region17
  $region16: #{annet_forward.1} parent=0 // pred_region
    _
  $region17: #{annet_forward.1} parent=0 // pred_fallthru
    _
  // Predicated region
  $region18: #{annet_forward.1} parent=0 // pred_check
    _
  $region19: #{annet_forward.1} parent=0 // pred_check_branch
    %164 = sbr.rel (0) target = $region21
  $region20: #{annet_forward.1} parent=0 // pred_region
    _
  $region21: #{annet_forward.1} parent=0 // pred_fallthru
    _

</llo_original>
